<compile_context>
chip_gen: v5e
topology: v5e:2x2
jax: 0.10.0
libtpu: 0.0.40
codegen_flags: <defaults>
</compile_context>

<pallas_src>
import functools
import math

import jax
import jax.numpy as jnp
from jax.experimental import pallas as pl
from jax.experimental.pallas import tpu as pltpu


# ---------------------------------------------------------------------------
# One-time host-side hardware query: v7x has 2 TensorCores/chip, v5e/v6e have 1.
# ---------------------------------------------------------------------------
def _tensorcores_per_chip():
    kind = jax.devices()[0].device_kind.lower()
    return 2 if ("v7" in kind or "7x" in kind) else 1


_N_TC = _tensorcores_per_chip()
# CORE_PARALLEL is the semantics that actually shards a grid axis across the
# two v7x TensorCores; fall back to "parallel" if the installed jax lacks it.
_CORE_PARALLEL = getattr(pltpu, "CORE_PARALLEL", "parallel")


def _mlp_kernel(L, first_layer_bias, *refs):
    """refs = (x_ref, w0, [b0], w1, ..., w_{L-1}, out_ref); all resident in VMEM.

    x / weights arrive as bf16 MXU operands; accumulation, bias add and ReLU
    run in f32 on the VPU; activations are re-cast to bf16 only as the next
    layer's matmul input.
    """
    x_ref = refs[0]
    out_ref = refs[-1]
    compute_dtype = x_ref.dtype

    h = x_ref[...]
    idx = 1
    for k in range(L):
        w = refs[idx][...]
        idx += 1
        acc = jnp.dot(h, w, preferred_element_type=jnp.float32)  # f32 accumulate
        if k == 0 and first_layer_bias:
            acc = acc + refs[idx][...]  # (1, out) f32 bias, broadcast add
            idx += 1
        if k < L - 1:
            h = jnp.maximum(acc, 0.0).astype(compute_dtype)  # ReLU, bf16 for next MXU op
        else:
            out_ref[...] = acc.astype(out_ref.dtype)


def _choose_tile_b(B, n_tc, cap=1024):
    """Batch tile: multiple of 16 (bf16 sublane packing); single grid step on
    1-TC chips; two grid steps on v7x so both TensorCores get work; never
    below 256 unless B itself is smaller."""
    if n_tc >= 2 and B % 32 == 0 and B // 2 >= 256:
        return B // 2
    if B <= cap:
        return B
    for cand in range(cap - cap % 16, 255, -16):
        if B % cand == 0:
            return cand
    return B  # no aligned divisor: single full-extent block


def prepare_homo_mlp_params(weights, bias0, first_layer_bias,
                            compute_dtype=jnp.bfloat16):
    """One-time preprocessing (hoisted out of the per-call path):
    cast weights to the bf16 MXU operand dtype and zero-pad the last layer's
    output dim to a multiple of 128 so kernel output stores are lane-dense."""
    L = len(weights)
    dimO = int(weights[-1].shape[1])
    dimO_pad = -(-dimO // 128) * 128
    w_list = [jnp.asarray(w, compute_dtype) for w in weights]
    if dimO_pad != dimO:
        w_list[-1] = jnp.pad(w_list[-1], ((0, 0), (0, dimO_pad - dimO)))
    b0 = None
    if first_layer_bias:
        b0 = jnp.asarray(bias0, jnp.float32)
        if L == 1 and b0.shape[1] != dimO_pad:
            b0 = jnp.pad(b0, ((0, 0), (0, dimO_pad - b0.shape[1])))
    return w_list, b0, dimO


@functools.partial(jax.jit, static_argnames=("dimO", "first_layer_bias"))
def homo_mlp_forward(x, w_list, b0, dimO, first_layer_bias):
    """x: (B, dimD) f32. w_list/b0: output of prepare_homo_mlp_params."""
    B, dimD = x.shape
    L = len(w_list)
    dimO_pad = int(w_list[-1].shape[1])
    compute_dtype = w_list[0].dtype

    tile_b = _choose_tile_b(B, _N_TC)
    grid_n = B // tile_b
    if grid_n > 1 and _N_TC >= 2:
        dim_sem = (_CORE_PARALLEL,)   # shard the batch axis across v7x cores
    else:
        dim_sem = ("arbitrary",)      # 1 TC: grid is a serial loop anyway

    x_c = x.astype(compute_dtype)     # fuses with the call under jit

    inputs = [x_c, w_list[0]]
    in_specs = [pl.BlockSpec((tile_b, dimD), lambda i: (i, 0)),
                pl.BlockSpec(w_list[0].shape, lambda i: (0, 0))]
    if first_layer_bias:
        inputs.append(b0)
        in_specs.append(pl.BlockSpec(b0.shape, lambda i: (0, 0)))
    for w in w_list[1:]:
        inputs.append(w)
        in_specs.append(pl.BlockSpec(w.shape, lambda i: (0, 0)))

    flops = 2 * B * sum(int(w.shape[0]) * int(w.shape[1]) for w in w_list)
    bytes_accessed = (int(x_c.size) * x_c.dtype.itemsize
                      + sum(int(w.size) * w.dtype.itemsize for w in w_list)
                      + (int(b0.size) * b0.dtype.itemsize if first_layer_bias else 0)
                      + B * dimO_pad * jnp.dtype(x.dtype).itemsize)
    cost = pl.CostEstimate(flops=flops, transcendentals=0,
                           bytes_accessed=int(bytes_accessed))

    kernel = functools.partial(_mlp_kernel, L, first_layer_bias)

    out_padded = pl.pallas_call(
        kernel,
        out_shape=jax.ShapeDtypeStruct((B, dimO_pad), x.dtype),
        grid=(grid_n,),
        in_specs=in_specs,
        out_specs=pl.BlockSpec((tile_b, dimO_pad), lambda i: (i, 0)),
        compiler_params=pltpu.CompilerParams(dimension_semantics=dim_sem),
        cost_estimate=cost,
    )(*inputs)

    # Slice off the lane padding; fuses with the call under jit.
    return out_padded[:, :dimO] if dimO_pad != dimO else out_padded


def init_homo_mlp_params(key, init_scale, L, dimD, dimH, dimO, first_layer_bias):
    """Deterministic He (kaiming_normal_) init matching the PyTorch __init__.

    PyTorch weight is (out, in); kaiming_normal_ with mode='fan_in' uses
    fan_in = in_features, std = gain / sqrt(fan_in), gain = sqrt(2) for relu,
    1.0 for linear. We store weights transposed as (in, out). Biases (only on
    the first layer, if enabled) are zero. Weights are scaled by init_scale.
    """
    weights = []
    dim_last = dimD
    keys = jax.random.split(key, L)
    for k in range(L):
        dim_next = dimH if k < L - 1 else dimO
        gain = math.sqrt(2.0) if k < L - 1 else 1.0
        std = gain / math.sqrt(dim_last)
        w = jax.random.normal(keys[k], (dim_last, dim_next), dtype=jnp.float32) * std
        weights.append(w * init_scale)
        dim_last = dim_next
    bias0 = (jnp.zeros((1, dimH if L > 1 else dimO), dtype=jnp.float32)
             if first_layer_bias else None)
    return weights, bias0


def homo_mlp_reference(x, weights, bias0, first_layer_bias):
    """Plain-JAX f32 reference mirroring the torch forward."""
    h = x
    L = len(weights)
    for k, w in enumerate(weights):
        h = h @ w
        if k == 0 and first_layer_bias:
            h = h + bias0
        if k < L - 1:
            h = jnp.maximum(h, 0.0)
    return h


if __name__ == "__main__":
    # Module hyperparameters (small, consistent with the MLP forward on (B, dimD)).
    init_scale = 0.5
    L = 3
    dimD = 128
    dimH = 128
    dimO = 8
    first_layer_bias = True

    key = jax.random.PRNGKey(0)
    k_params, k_x = jax.random.split(key)

    weights, bias0 = init_homo_mlp_params(
        k_params, init_scale, L, dimD, dimH, dimO, first_layer_bias
    )
    # One-time preprocessing (hoisted out of the forward path).
    w_list, b0, dimO_real = prepare_homo_mlp_params(weights, bias0, first_layer_bias)

    B = 512
    x = jax.random.normal(k_x, (B, dimD), dtype=jnp.float32)

    out = homo_mlp_forward(x, w_list, b0,
                           dimO=dimO_real, first_layer_bias=first_layer_bias)
    out = jax.block_until_ready(out)

    ref = homo_mlp_reference(x, weights, bias0, first_layer_bias)
    assert out.shape == (B, dimO), out.shape
    # bf16 MXU operands with f32 accumulation -> loose-but-safe tolerance vs f32 ref.
    assert jnp.allclose(out, ref, atol=5e-2, rtol=5e-2), "mismatch vs reference"

    print("KERNEL_OK")
</pallas_src>

<mosaic_0001>
module attributes {stable_mosaic.version = 11 : i64} {
  func.func @_mlp_kernel(%arg0: i32, %arg1: memref<512x128xbf16, #tpu.memory_space<vmem>>, %arg2: memref<128x128xbf16, #tpu.memory_space<vmem>>, %arg3: memref<1x128xf32, #tpu.memory_space<vmem>>, %arg4: memref<128x128xbf16, #tpu.memory_space<vmem>>, %arg5: memref<128x128xbf16, #tpu.memory_space<vmem>>, %arg6: memref<512x128xf32, #tpu.memory_space<vmem>>) attributes {dimension_semantics = [#tpu.dimension_semantics<arbitrary>], iteration_bounds = array<i64: 1>, scalar_prefetch = 0 : i64, scratch_operands = 0 : i64, tpu.core_type = #tpu.core_type<tc>, window_params = [{transform_indices = @transform_0, window_bounds = array<i64: 512, 128>}, {pipeline_mode = #tpu.pipeline_mode<synchronous>, transform_indices = @transform_1, window_bounds = array<i64: 128, 128>}, {pipeline_mode = #tpu.pipeline_mode<synchronous>, transform_indices = @transform_2, window_bounds = array<i64: 1, 128>}, {pipeline_mode = #tpu.pipeline_mode<synchronous>, transform_indices = @transform_3, window_bounds = array<i64: 128, 128>}, {pipeline_mode = #tpu.pipeline_mode<synchronous>, transform_indices = @transform_4, window_bounds = array<i64: 128, 128>}, {transform_indices = @transform_5, window_bounds = array<i64: 512, 128>}]} {
    %c0 = arith.constant 0 : index
    %c0_0 = arith.constant 0 : index
    %0 = vector.load %arg1[%c0, %c0_0] : memref<512x128xbf16, #tpu.memory_space<vmem>>, vector<512x128xbf16>
    %c0_1 = arith.constant 0 : index
    %c0_2 = arith.constant 0 : index
    %1 = vector.load %arg2[%c0_1, %c0_2] : memref<128x128xbf16, #tpu.memory_space<vmem>>, vector<128x128xbf16>
    %cst = arith.constant dense<0.000000e+00> : vector<512x128xf32>
    %2 = tpu.matmul %0, %1, %cst {dimension_numbers = #tpu.dot_dimension_numbers<[1], [0], [0], [1], [0, 0, 1, 1], [], []>} : vector<512x128xbf16>, vector<128x128xbf16>, vector<512x128xf32> -> vector<512x128xf32>
    %c0_3 = arith.constant 0 : index
    %c0_4 = arith.constant 0 : index
    %3 = vector.load %arg3[%c0_3, %c0_4] : memref<1x128xf32, #tpu.memory_space<vmem>>, vector<1x128xf32>
    %4 = vector.broadcast %3 : vector<1x128xf32> to vector<512x128xf32>
    %5 = arith.addf %2, %4 : vector<512x128xf32>
    %cst_5 = arith.constant 0.000000e+00 : f32
    %6 = vector.broadcast %cst_5 : f32 to vector<512x128xf32>
    %7 = arith.maximumf %5, %6 : vector<512x128xf32>
    %8 = arith.truncf %7 : vector<512x128xf32> to vector<512x128xbf16>
    %c0_6 = arith.constant 0 : index
    %c0_7 = arith.constant 0 : index
    %9 = vector.load %arg4[%c0_6, %c0_7] : memref<128x128xbf16, #tpu.memory_space<vmem>>, vector<128x128xbf16>
    %cst_8 = arith.constant dense<0.000000e+00> : vector<512x128xf32>
    %10 = tpu.matmul %8, %9, %cst_8 {dimension_numbers = #tpu.dot_dimension_numbers<[1], [0], [0], [1], [0, 0, 1, 1], [], []>} : vector<512x128xbf16>, vector<128x128xbf16>, vector<512x128xf32> -> vector<512x128xf32>
    %cst_9 = arith.constant 0.000000e+00 : f32
    %11 = vector.broadcast %cst_9 : f32 to vector<512x128xf32>
    %12 = arith.maximumf %10, %11 : vector<512x128xf32>
    %13 = arith.truncf %12 : vector<512x128xf32> to vector<512x128xbf16>
    %c0_10 = arith.constant 0 : index
    %c0_11 = arith.constant 0 : index
    %14 = vector.load %arg5[%c0_10, %c0_11] : memref<128x128xbf16, #tpu.memory_space<vmem>>, vector<128x128xbf16>
    %cst_12 = arith.constant dense<0.000000e+00> : vector<512x128xf32>
    %15 = tpu.matmul %13, %14, %cst_12 {dimension_numbers = #tpu.dot_dimension_numbers<[1], [0], [0], [1], [0, 0, 1, 1], [], []>} : vector<512x128xbf16>, vector<128x128xbf16>, vector<512x128xf32> -> vector<512x128xf32>
    %c0_13 = arith.constant 0 : index
    %c0_14 = arith.constant 0 : index
    %16 = vector.load %arg6[%c0_13, %c0_14] : memref<512x128xf32, #tpu.memory_space<vmem>>, vector<512x128xf32>
    tpu.vector_store %arg6[%c0_13, %c0_14], %15 {strides = array<i32>} : memref<512x128xf32, #tpu.memory_space<vmem>>, vector<512x128xf32>,
    return
  }
  func.func @transform_0(%arg0: i32) -> (i32, i32) {
    %c0_i32 = arith.constant 0 : i32
    %c0_i32_0 = arith.constant 0 : i32
    return %arg0, %c0_i32 : i32, i32
  }
  func.func @transform_1(%arg0: i32) -> (i32, i32) {
    %c0_i32 = arith.constant 0 : i32
    %c0_i32_0 = arith.constant 0 : i32
    %c0_i32_1 = arith.constant 0 : i32
    return %c0_i32, %c0_i32_0 : i32, i32
  }
  func.func @transform_2(%arg0: i32) -> (i32, i32) {
    %c0_i32 = arith.constant 0 : i32
    %c0_i32_0 = arith.constant 0 : i32
    %c0_i32_1 = arith.constant 0 : i32
    return %c0_i32, %c0_i32_0 : i32, i32
  }
  func.func @transform_3(%arg0: i32) -> (i32, i32) {
    %c0_i32 = arith.constant 0 : i32
    %c0_i32_0 = arith.constant 0 : i32
    %c0_i32_1 = arith.constant 0 : i32
    return %c0_i32, %c0_i32_0 : i32, i32
  }
  func.func @transform_4(%arg0: i32) -> (i32, i32) {
    %c0_i32 = arith.constant 0 : i32
    %c0_i32_0 = arith.constant 0 : i32
    %c0_i32_1 = arith.constant 0 : i32
    return %c0_i32, %c0_i32_0 : i32, i32
  }
  func.func @transform_5(%arg0: i32) -> (i32, i32) {
    %c0_i32 = arith.constant 0 : i32
    %c0_i32_0 = arith.constant 0 : i32
    return %arg0, %c0_i32 : i32, i32
  }
}

</mosaic_0001>

<llo_original>
// kernel: homo_mlp_forward.1
$region0: #{homo_mlp_forward.1}
  #allocation0 [shape = 'u32[]', space=smem, size = 0x4, offset = 0x4, fixed_abs, tag = 'smem constant byte address 0x4 - core index']
  #allocation1 [shape = 'u32[72,128]{1,0:T(1,128)}', space=vmem, size = 0x9000, scoped, tag = 'internal scratch']
  %s0 = inlined_call_operand.vmem [shape: bf16[512,128], index: 0, kind: input, shape index: {}]
  %s1 = inlined_call_operand.vmem [shape: bf16[128,128], index: 1, kind: input, shape index: {}]
  %s2 = inlined_call_operand.vmem [shape: f32[1,128], index: 2, kind: input, shape index: {}]
  %s3 = inlined_call_operand.vmem [shape: bf16[128,128], index: 3, kind: input, shape index: {}]
  %s4 = inlined_call_operand.vmem [shape: bf16[128,128], index: 4, kind: input, shape index: {}]
  %s5 = inlined_call_operand.vmem [shape: f32[512,128], index: 5, kind: output, shape index: {}]
  %s6 = sld [smem:[#allocation0]]
  $region30: #{homo_mlp_forward.1} parent=0
    _
  %s8 = ssub.s32 1, %s6
  %s9 = scalar_select 0, %s8, %s6
  // Predicated region
  $region2: #{homo_mlp_forward.1} parent=0 // pred_check
    _
  $region3: #{homo_mlp_forward.1} parent=0 // pred_check_branch
    %11 = sbr.rel (0) target = $region5
  $region4: #{homo_mlp_forward.1} parent=0 // pred_region
    _
  $region5: #{homo_mlp_forward.1} parent=0 // pred_fallthru
    _
  // Predicated region
  $region6: #{homo_mlp_forward.1} parent=0 // pred_check
    _
  $region7: #{homo_mlp_forward.1} parent=0 // pred_check_branch
    %13 = sbr.rel (0) target = $region9
  $region8: #{homo_mlp_forward.1} parent=0 // pred_region
    _
  $region9: #{homo_mlp_forward.1} parent=0 // pred_fallthru
    _
  // Predicated region
  $region10: #{homo_mlp_forward.1} parent=0 // pred_check
    _
  $region11: #{homo_mlp_forward.1} parent=0 // pred_check_branch
    %15 = sbr.rel (0) target = $region13
  $region12: #{homo_mlp_forward.1} parent=0 // pred_region
    _
  $region13: #{homo_mlp_forward.1} parent=0 // pred_fallthru
    _
  // Predicated region
  $region14: #{homo_mlp_forward.1} parent=0 // pred_check
    _
  $region15: #{homo_mlp_forward.1} parent=0 // pred_check_branch
    %17 = sbr.rel (0) target = $region17
  $region16: #{homo_mlp_forward.1} parent=0 // pred_region
    _
  $region17: #{homo_mlp_forward.1} parent=0 // pred_fallthru
    _
  // Predicated region
  $region18: #{homo_mlp_forward.1} parent=0 // pred_check
    _
  $region19: #{homo_mlp_forward.1} parent=0 // pred_check_branch
    %19 = sbr.rel (0) target = $region21
  $region20: #{homo_mlp_forward.1} parent=0 // pred_region
    _
  $region21: #{homo_mlp_forward.1} parent=0 // pred_fallthru
    _
  %v20 = vld [vmem:[%s0] sm:$0xf]
  %v21 = vld [vmem:[%s0 + $0x4] sm:$0xf]
  %v22 = vld [vmem:[%s0 + $0x8] sm:$0xf]
  %v23 = vld [vmem:[%s0 + $0xc] sm:$0xf]
  %v24 = vld [vmem:[%s0 + $0x10] sm:$0xf]
  %v25 = vld [vmem:[%s0 + $0x14] sm:$0xf]
  %v26 = vld [vmem:[%s0 + $0x18] sm:$0xf]
  %v27 = vld [vmem:[%s0 + $0x1c] sm:$0xf]
  %v28 = vld [vmem:[%s0 + $0x20] sm:$0xf]
  %v29 = vld [vmem:[%s0 + $0x24] sm:$0xf]
  %v30 = vld [vmem:[%s0 + $0x28] sm:$0xf]
  %v31 = vld [vmem:[%s0 + $0x2c] sm:$0xf]
  %v32 = vld [vmem:[%s0 + $0x30] sm:$0xf]
  %v33 = vld [vmem:[%s0 + $0x34] sm:$0xf]
  %v34 = vld [vmem:[%s0 + $0x38] sm:$0xf]
  %v35 = vld [vmem:[%s0 + $0x3c] sm:$0xf]
  %v36 = vld [vmem:[%s0 + $0x40] sm:$0xf]
  %v37 = vld [vmem:[%s0 + $0x44] sm:$0xf]
  %v38 = vld [vmem:[%s0 + $0x48] sm:$0xf]
  %v39 = vld [vmem:[%s0 + $0x4c] sm:$0xf]
  %v40 = vld [vmem:[%s0 + $0x50] sm:$0xf]
  %v41 = vld [vmem:[%s0 + $0x54] sm:$0xf]
  %v42 = vld [vmem:[%s0 + $0x58] sm:$0xf]
  %v43 = vld [vmem:[%s0 + $0x5c] sm:$0xf]
  %v44 = vld [vmem:[%s0 + $0x60] sm:$0xf]
  %v45 = vld [vmem:[%s0 + $0x64] sm:$0xf]
  %v46 = vld [vmem:[%s0 + $0x68] sm:$0xf]
  %v47 = vld [vmem:[%s0 + $0x6c] sm:$0xf]
  %v48 = vld [vmem:[%s0 + $0x70] sm:$0xf]
  %v49 = vld [vmem:[%s0 + $0x74] sm:$0xf]
  %v50 = vld [vmem:[%s0 + $0x78] sm:$0xf]
  %v51 = vld [vmem:[%s0 + $0x7c] sm:$0xf]
  %v52 = vld [vmem:[%s0 + $0x80] sm:$0xf]
  %v53 = vld [vmem:[%s0 + $0x84] sm:$0xf]
  %v54 = vld [vmem:[%s0 + $0x88] sm:$0xf]
  %v55 = vld [vmem:[%s0 + $0x8c] sm:$0xf]
  %v56 = vld [vmem:[%s0 + $0x90] sm:$0xf]
  %v57 = vld [vmem:[%s0 + $0x94] sm:$0xf]
  %v58 = vld [vmem:[%s0 + $0x98] sm:$0xf]
  %v59 = vld [vmem:[%s0 + $0x9c] sm:$0xf]
  %v60 = vld [vmem:[%s0 + $0xa0] sm:$0xf]
  %v61 = vld [vmem:[%s0 + $0xa4] sm:$0xf]
  %v62 = vld [vmem:[%s0 + $0xa8] sm:$0xf]
  %v63 = vld [vmem:[%s0 + $0xac] sm:$0xf]
  %v64 = vld [vmem:[%s0 + $0xb0] sm:$0xf]
  %v65 = vld [vmem:[%s0 + $0xb4] sm:$0xf]
  %v66 = vld [vmem:[%s0 + $0xb8] sm:$0xf]
  %v67 = vld [vmem:[%s0 + $0xbc] sm:$0xf]
  %v68 = vld [vmem:[%s0 + $0xc0] sm:$0xf]
  %v69 = vld [vmem:[%s0 + $0xc4] sm:$0xf]
  %v70 = vld [vmem:[%s0 + $0xc8] sm:$0xf]
  %v71 = vld [vmem:[%s0 + $0xcc] sm:$0xf]
  %v72 = vld [vmem:[%s0 + $0xd0] sm:$0xf]
  %v73 = vld [vmem:[%s0 + $0xd4] sm:$0xf]
  %v74 = vld [vmem:[%s0 + $0xd8] sm:$0xf]
  %v75 = vld [vmem:[%s0 + $0xdc] sm:$0xf]
  %v76 = vld [vmem:[%s0 + $0xe0] sm:$0xf]
  %v77 = vld [vmem:[%s0 + $0xe4] sm:$0xf]
  %v78 = vld [vmem:[%s0 + $0xe8] sm:$0xf]
  %v79 = vld [vmem:[%s0 + $0xec] sm:$0xf]
  %v80 = vld [vmem:[%s0 + $0xf0] sm:$0xf]
  %v81 = vld [vmem:[%s0 + $0xf4] sm:$0xf]
  %v82 = vld [vmem:[%s0 + $0xf8] sm:$0xf]
  %v83 = vld [vmem:[%s0 + $0xfc] sm:$0xf]
  %v84 = vld [vmem:[%s1] sm:$0xf]
  %v85 = vld [vmem:[%s1 + $0x4] sm:$0xf]
  %v86 = vld [vmem:[%s1 + $0x8] sm:$0xf]
  %v87 = vld [vmem:[%s1 + $0xc] sm:$0xf]
  %v88 = vld [vmem:[%s1 + $0x10] sm:$0xf]
  %v89 = vld [vmem:[%s1 + $0x14] sm:$0xf]
  %v90 = vld [vmem:[%s1 + $0x18] sm:$0xf]
  %v91 = vld [vmem:[%s1 + $0x1c] sm:$0xf]
  %v92 = vld [vmem:[%s1 + $0x20] sm:$0xf]
  %v93 = vld [vmem:[%s1 + $0x24] sm:$0xf]
  %v94 = vld [vmem:[%s1 + $0x28] sm:$0xf]
  %v95 = vld [vmem:[%s1 + $0x2c] sm:$0xf]
  %v96 = vld [vmem:[%s1 + $0x30] sm:$0xf]
  %v97 = vld [vmem:[%s1 + $0x34] sm:$0xf]
  %v98 = vld [vmem:[%s1 + $0x38] sm:$0xf]
  %v99 = vld [vmem:[%s1 + $0x3c] sm:$0xf]
  %v100 = vld [vmem:[%s2] sm:$0x1]
  %v102 = vperm.slane %v100, 0
  %v168 = vunpack.c.l.b16 %v20
  %v169 = vunpack.c.l.b16 %v21
  %v170 = vunpack.c.l.b16 %v22
  %v171 = vunpack.c.l.b16 %v23
  %v172 = vunpack.c.l.b16 %v24
  %v173 = vunpack.c.l.b16 %v25
  %v174 = vunpack.c.l.b16 %v26
  %v175 = vunpack.c.l.b16 %v27
  %v176 = vunpack.c.l.b16 %v28
  %v177 = vunpack.c.l.b16 %v29
  %v178 = vunpack.c.l.b16 %v30
  %v179 = vunpack.c.l.b16 %v31
  %v180 = vunpack.c.l.b16 %v32
  %v181 = vunpack.c.l.b16 %v33
  %v182 = vunpack.c.l.b16 %v34
  %v183 = vunpack.c.l.b16 %v35
  %v184 = vunpack.c.l.b16 %v36
  %v185 = vunpack.c.l.b16 %v37
  %v186 = vunpack.c.l.b16 %v38
  %v187 = vunpack.c.l.b16 %v39
  %v188 = vunpack.c.l.b16 %v40
  %v189 = vunpack.c.l.b16 %v41
  %v190 = vunpack.c.l.b16 %v42
  %v191 = vunpack.c.l.b16 %v43
  %v192 = vunpack.c.l.b16 %v44
  %v193 = vunpack.c.l.b16 %v45
  %v194 = vunpack.c.l.b16 %v46
  %v195 = vunpack.c.l.b16 %v47
  %v196 = vunpack.c.l.b16 %v48
  %v197 = vunpack.c.l.b16 %v49
  %v198 = vunpack.c.l.b16 %v50
  %v199 = vunpack.c.l.b16 %v51
  %v200 = vunpack.c.l.b16 %v52
  %v201 = vunpack.c.l.b16 %v53
  %v202 = vunpack.c.l.b16 %v54
  %v203 = vunpack.c.l.b16 %v55
  %v204 = vunpack.c.l.b16 %v56
  %v205 = vunpack.c.l.b16 %v57
  %v206 = vunpack.c.l.b16 %v58
  %v207 = vunpack.c.l.b16 %v59
  %v208 = vunpack.c.l.b16 %v60
  %v209 = vunpack.c.l.b16 %v61
  %v210 = vunpack.c.l.b16 %v62
  %v211 = vunpack.c.l.b16 %v63
  %v212 = vunpack.c.l.b16 %v64
  %v213 = vunpack.c.l.b16 %v65
  %v214 = vunpack.c.l.b16 %v66
  %v215 = vunpack.c.l.b16 %v67
  %v216 = vunpack.c.l.b16 %v68
  %v217 = vunpack.c.l.b16 %v69
  %v218 = vunpack.c.l.b16 %v70
  %v219 = vunpack.c.l.b16 %v71
  %v220 = vunpack.c.l.b16 %v72
  %v221 = vunpack.c.l.b16 %v73
  %v222 = vunpack.c.l.b16 %v74
  %v223 = vunpack.c.l.b16 %v75
  %v224 = vunpack.c.l.b16 %v76
  %v225 = vunpack.c.l.b16 %v77
  %v226 = vunpack.c.l.b16 %v78
  %v227 = vunpack.c.l.b16 %v79
  %v228 = vunpack.c.l.b16 %v80
  %v229 = vunpack.c.l.b16 %v81
  %v230 = vunpack.c.l.b16 %v82
  %v231 = vunpack.c.l.b16 %v83
  %v232 = vpack.c.b16 %v169, %v168
  %v233 = vpack.c.b16 %v171, %v170
  %v234 = vpack.c.b16 %v173, %v172
  %v235 = vpack.c.b16 %v175, %v174
  %v236 = vpack.c.b16 %v177, %v176
  %v237 = vpack.c.b16 %v179, %v178
  %v238 = vpack.c.b16 %v181, %v180
  %v239 = vpack.c.b16 %v183, %v182
  %v240 = vpack.c.b16 %v185, %v184
  %v241 = vpack.c.b16 %v187, %v186
  %v242 = vpack.c.b16 %v189, %v188
  %v243 = vpack.c.b16 %v191, %v190
  %v244 = vpack.c.b16 %v193, %v192
  %v245 = vpack.c.b16 %v195, %v194
  %v246 = vpack.c.b16 %v197, %v196
  %v247 = vpack.c.b16 %v199, %v198
  %v248 = vpack.c.b16 %v201, %v200
  %v249 = vpack.c.b16 %v203, %v202
  %v250 = vpack.c.b16 %v205, %v204
  %v251 = vpack.c.b16 %v207, %v206
  %v252 = vpack.c.b16 %v209, %v208
  %v253 = vpack.c.b16 %v211, %v210
  %v254 = vpack.c.b16 %v213, %v212
  %v255 = vpack.c.b16 %v215, %v214
  %v256 = vpack.c.b16 %v217, %v216
  %v257 = vpack.c.b16 %v219, %v218
  %v258 = vpack.c.b16 %v221, %v220
  %v259 = vpack.c.b16 %v223, %v222
  %v260 = vpack.c.b16 %v225, %v224
  %v261 = vpack.c.b16 %v227, %v226
  %v262 = vpack.c.b16 %v229, %v228
  %v263 = vpack.c.b16 %v231, %v230
  %v312 = vunpack.c.l.b16 %v84
  %v313 = vunpack.c.l.b16 %v85
  %v314 = vunpack.c.l.b16 %v86
  %v315 = vunpack.c.l.b16 %v87
  %v316 = vunpack.c.l.b16 %v88
  %v317 = vunpack.c.l.b16 %v89
  %v318 = vunpack.c.l.b16 %v90
  %v319 = vunpack.c.l.b16 %v91
  %v320 = vunpack.c.l.b16 %v92
  %v321 = vunpack.c.l.b16 %v93
  %v322 = vunpack.c.l.b16 %v94
  %v323 = vunpack.c.l.b16 %v95
  %v324 = vunpack.c.l.b16 %v96
  %v325 = vunpack.c.l.b16 %v97
  %v326 = vunpack.c.l.b16 %v98
  %v327 = vunpack.c.l.b16 %v99
  %v328 = vpack.c.b16 %v313, %v312
  %v329 = vpack.c.b16 %v315, %v314
  %v330 = vpack.c.b16 %v317, %v316
  %v331 = vpack.c.b16 %v319, %v318
  %v332 = vpack.c.b16 %v321, %v320
  %v333 = vpack.c.b16 %v323, %v322
  %v334 = vpack.c.b16 %v325, %v324
  %v335 = vpack.c.b16 %v327, %v326
  %344 = vmatpush.bf16.msra.mxu0 %v335
  %345 = vmatpush.bf16.msra.mxu0 %v334
  %346 = vmatpush.bf16.msra.mxu0 %v333
  %347 = vmatpush.bf16.msra.mxu0 %v332
  %348 = vmatpush.bf16.msra.mxu0 %v331
  %349 = vmatpush.bf16.msra.mxu0 %v330
  %350 = vmatpush.bf16.msra.mxu0 %v329
  %351 = vmatpush.bf16.msra.mxu0 %v328
  %352 = vmatmul.bf16.gmra.mxu0 %v232
  %v353 = vpop.f32.mrf.mxu0
  %v354 = vadd.f32 %v102, %v353
  %v355 = vpop.f32.mrf.mxu0
  %v356 = vadd.f32 %v102, %v355
  %357 = vmatmul.bf16.gmra.mxu0 %v233
  %v358 = vpop.f32.mrf.mxu0
  %v359 = vadd.f32 %v102, %v358
  %v360 = vpop.f32.mrf.mxu0
  %v361 = vadd.f32 %v102, %v360
  %362 = vmatmul.bf16.gmra.mxu0 %v234
  %v363 = vpop.f32.mrf.mxu0
  %v364 = vadd.f32 %v102, %v363
  %v365 = vpop.f32.mrf.mxu0
  %v366 = vadd.f32 %v102, %v365
  %367 = vmatmul.bf16.gmra.mxu0 %v235
  %v368 = vpop.f32.mrf.mxu0
  %v369 = vadd.f32 %v102, %v368
  %v370 = vpop.f32.mrf.mxu0
  %v371 = vadd.f32 %v102, %v370
  %372 = vmatmul.bf16.gmra.mxu0 %v236
  %v373 = vpop.f32.mrf.mxu0
  %v374 = vadd.f32 %v102, %v373
  %v375 = vpop.f32.mrf.mxu0
  %v376 = vadd.f32 %v102, %v375
  %377 = vmatmul.bf16.gmra.mxu0 %v237
  %v378 = vpop.f32.mrf.mxu0
  %v379 = vadd.f32 %v102, %v378
  %v380 = vpop.f32.mrf.mxu0
  %v381 = vadd.f32 %v102, %v380
  %382 = vmatmul.bf16.gmra.mxu0 %v238
  %v383 = vpop.f32.mrf.mxu0
  %v384 = vadd.f32 %v102, %v383
  %v385 = vpop.f32.mrf.mxu0
  %v386 = vadd.f32 %v102, %v385
  %387 = vmatmul.bf16.gmra.mxu0 %v239
  %v388 = vpop.f32.mrf.mxu0
  %v389 = vadd.f32 %v102, %v388
  %v390 = vpop.f32.mrf.mxu0
  %v391 = vadd.f32 %v102, %v390
  %392 = vmatmul.bf16.gmra.mxu0 %v240
  %v393 = vpop.f32.mrf.mxu0
  %v394 = vadd.f32 %v102, %v393
  %v395 = vpop.f32.mrf.mxu0
  %v396 = vadd.f32 %v102, %v395
  %397 = vmatmul.bf16.gmra.mxu0 %v241
  %v398 = vpop.f32.mrf.mxu0
  %v399 = vadd.f32 %v102, %v398
  %v400 = vpop.f32.mrf.mxu0
  %v401 = vadd.f32 %v102, %v400
  %402 = vmatmul.bf16.gmra.mxu0 %v242
  %v403 = vpop.f32.mrf.mxu0
  %v404 = vadd.f32 %v102, %v403
  %v405 = vpop.f32.mrf.mxu0
  %v406 = vadd.f32 %v102, %v405
  %407 = vmatmul.bf16.gmra.mxu0 %v243
  %v408 = vpop.f32.mrf.mxu0
  %v409 = vadd.f32 %v102, %v408
  %v410 = vpop.f32.mrf.mxu0
  %v411 = vadd.f32 %v102, %v410
  %412 = vmatmul.bf16.gmra.mxu0 %v244
  %v413 = vpop.f32.mrf.mxu0
  %v414 = vadd.f32 %v102, %v413
  %v415 = vpop.f32.mrf.mxu0
  %v416 = vadd.f32 %v102, %v415
  %417 = vmatmul.bf16.gmra.mxu0 %v245
  %v418 = vpop.f32.mrf.mxu0
  %v419 = vadd.f32 %v102, %v418
  %v420 = vpop.f32.mrf.mxu0
  %v421 = vadd.f32 %v102, %v420
  %422 = vmatmul.bf16.gmra.mxu0 %v246
  %v423 = vpop.f32.mrf.mxu0
  %v424 = vadd.f32 %v102, %v423
  %v425 = vpop.f32.mrf.mxu0
  %v426 = vadd.f32 %v102, %v425
  %427 = vmatmul.bf16.gmra.mxu0 %v247
  %v428 = vpop.f32.mrf.mxu0
  %v429 = vadd.f32 %v102, %v428
  %v430 = vpop.f32.mrf.mxu0
  %v431 = vadd.f32 %v102, %v430
  %432 = vmatmul.bf16.gmra.mxu0 %v248
  %v433 = vpop.f32.mrf.mxu0
  %v434 = vadd.f32 %v102, %v433
  %v435 = vpop.f32.mrf.mxu0
  %v436 = vadd.f32 %v102, %v435
  %437 = vmatmul.bf16.gmra.mxu0 %v249
  %v438 = vpop.f32.mrf.mxu0
  %v439 = vadd.f32 %v102, %v438
  %v440 = vpop.f32.mrf.mxu0
  %v441 = vadd.f32 %v102, %v440
  %442 = vmatmul.bf16.gmra.mxu0 %v250
  %v443 = vpop.f32.mrf.mxu0
  %v444 = vadd.f32 %v102, %v443
  %v445 = vpop.f32.mrf.mxu0
  %v446 = vadd.f32 %v102, %v445
  %447 = vmatmul.bf16.gmra.mxu0 %v251
  %v448 = vpop.f32.mrf.mxu0
  %v449 = vadd.f32 %v102, %v448
  %v450 = vpop.f32.mrf.mxu0
  %v451 = vadd.f32 %v102, %v450
  %452 = vmatmul.bf16.gmra.mxu0 %v252
  %v453 = vpop.f32.mrf.mxu0
  %v454 = vadd.f32 %v102, %v453
  %v455 = vpop.f32.mrf.mxu0
  %v456 = vadd.f32 %v102, %v455
  %457 = vmatmul.bf16.gmra.mxu0 %v253
  %v458 = vpop.f32.mrf.mxu0
  %v459 = vadd.f32 %v102, %v458
  %v460 = vpop.f32.mrf.mxu0
  %v461 = vadd.f32 %v102, %v460
  %462 = vmatmul.bf16.gmra.mxu0 %v254
  %v463 = vpop.f32.mrf.mxu0
  %v464 = vadd.f32 %v102, %v463
  %v465 = vpop.f32.mrf.mxu0
  %v466 = vadd.f32 %v102, %v465
  %467 = vmatmul.bf16.gmra.mxu0 %v255
  %v468 = vpop.f32.mrf.mxu0
  %v469 = vadd.f32 %v102, %v468
  %v470 = vpop.f32.mrf.mxu0
  %v471 = vadd.f32 %v102, %v470
  %472 = vmatmul.bf16.gmra.mxu0 %v256
  %v473 = vpop.f32.mrf.mxu0
  %v474 = vadd.f32 %v102, %v473
  %v475 = vpop.f32.mrf.mxu0
  %v476 = vadd.f32 %v102, %v475
  %477 = vmatmul.bf16.gmra.mxu0 %v257
  %v478 = vpop.f32.mrf.mxu0
  %v479 = vadd.f32 %v102, %v478
  %v480 = vpop.f32.mrf.mxu0
  %v481 = vadd.f32 %v102, %v480
  %482 = vmatmul.bf16.gmra.mxu0 %v258
  %v483 = vpop.f32.mrf.mxu0
  %v484 = vadd.f32 %v102, %v483
  %v485 = vpop.f32.mrf.mxu0
  %v486 = vadd.f32 %v102, %v485
  %487 = vmatmul.bf16.gmra.mxu0 %v259
  %v488 = vpop.f32.mrf.mxu0
  %v489 = vadd.f32 %v102, %v488
  %v490 = vpop.f32.mrf.mxu0
  %v491 = vadd.f32 %v102, %v490
  %492 = vmatmul.bf16.gmra.mxu0 %v260
  %v493 = vpop.f32.mrf.mxu0
  %v494 = vadd.f32 %v102, %v493
  %v495 = vpop.f32.mrf.mxu0
  %v496 = vadd.f32 %v102, %v495
  %497 = vmatmul.bf16.gmra.mxu0 %v261
  %v498 = vpop.f32.mrf.mxu0
  %v499 = vadd.f32 %v102, %v498
  %v500 = vpop.f32.mrf.mxu0
  %v501 = vadd.f32 %v102, %v500
  %502 = vmatmul.bf16.gmra.mxu0 %v262
  %v503 = vpop.f32.mrf.mxu0
  %v504 = vadd.f32 %v102, %v503
  %v505 = vpop.f32.mrf.mxu0
  %v506 = vadd.f32 %v102, %v505
  %507 = vmatmul.bf16.gmra.mxu0 %v263
  %v508 = vpop.f32.mrf.mxu0
  %v509 = vadd.f32 %v102, %v508
  %v510 = vpop.f32.mrf.mxu0
  %v511 = vadd.f32 %v102, %v510
  %512 = vdwg.mxu0
  %v513 = vmax.f32 %v354, 0.0
  %v514 = vmax.f32 %v356, 0.0
  %v515 = vmax.f32 %v359, 0.0
  %v516 = vmax.f32 %v361, 0.0
  %v517 = vmax.f32 %v364, 0.0
  %v518 = vmax.f32 %v366, 0.0
  %v519 = vmax.f32 %v369, 0.0
  %v520 = vmax.f32 %v371, 0.0
  %v521 = vmax.f32 %v374, 0.0
  %v522 = vmax.f32 %v376, 0.0
  %v523 = vmax.f32 %v379, 0.0
  %v524 = vmax.f32 %v381, 0.0
  %v525 = vmax.f32 %v384, 0.0
  %v526 = vmax.f32 %v386, 0.0
  %v527 = vmax.f32 %v389, 0.0
  %v528 = vmax.f32 %v391, 0.0
  %v529 = vmax.f32 %v394, 0.0
  %v530 = vmax.f32 %v396, 0.0
  %v531 = vmax.f32 %v399, 0.0
  %v532 = vmax.f32 %v401, 0.0
  %v533 = vmax.f32 %v404, 0.0
  %v534 = vmax.f32 %v406, 0.0
  %v535 = vmax.f32 %v409, 0.0
  %v536 = vmax.f32 %v411, 0.0
  %v537 = vmax.f32 %v414, 0.0
  %v538 = vmax.f32 %v416, 0.0
  %v539 = vmax.f32 %v419, 0.0
  %v540 = vmax.f32 %v421, 0.0
  %v541 = vmax.f32 %v424, 0.0
  %v542 = vmax.f32 %v426, 0.0
  %v543 = vmax.f32 %v429, 0.0
  %v544 = vmax.f32 %v431, 0.0
  %v545 = vmax.f32 %v434, 0.0
  %v546 = vmax.f32 %v436, 0.0
  %v547 = vmax.f32 %v439, 0.0
  %v548 = vmax.f32 %v441, 0.0
  %v549 = vmax.f32 %v444, 0.0
  %v550 = vmax.f32 %v446, 0.0
  %v551 = vmax.f32 %v449, 0.0
  %v552 = vmax.f32 %v451, 0.0
  %v553 = vmax.f32 %v454, 0.0
  %v554 = vmax.f32 %v456, 0.0
  %v555 = vmax.f32 %v459, 0.0
  %v556 = vmax.f32 %v461, 0.0
  %v557 = vmax.f32 %v464, 0.0
  %v558 = vmax.f32 %v466, 0.0
  %v559 = vmax.f32 %v469, 0.0
  %v560 = vmax.f32 %v471, 0.0
  %v561 = vmax.f32 %v474, 0.0
  %v562 = vmax.f32 %v476, 0.0
  %v563 = vmax.f32 %v479, 0.0
  %v564 = vmax.f32 %v481, 0.0
  %v565 = vmax.f32 %v484, 0.0
  %v566 = vmax.f32 %v486, 0.0
  %v567 = vmax.f32 %v489, 0.0
  %v568 = vmax.f32 %v491, 0.0
  %v569 = vmax.f32 %v494, 0.0
  %v570 = vmax.f32 %v496, 0.0
  %v571 = vmax.f32 %v499, 0.0
  %v572 = vmax.f32 %v501, 0.0
  %v573 = vmax.f32 %v504, 0.0
  %v574 = vmax.f32 %v506, 0.0
  %v575 = vmax.f32 %v509, 0.0
  %v576 = vmax.f32 %v511, 0.0
  %v577 = vpack.c.bf16 %v514, %v513
  %v578 = vpack.c.bf16 %v516, %v515
  %v579 = vpack.c.bf16 %v518, %v517
  %v580 = vpack.c.bf16 %v520, %v519
  %v581 = vpack.c.bf16 %v522, %v521
  %v582 = vpack.c.bf16 %v524, %v523
  %v583 = vpack.c.bf16 %v526, %v525
  %v584 = vpack.c.bf16 %v528, %v527
  %v585 = vpack.c.bf16 %v530, %v529
  %v586 = vpack.c.bf16 %v532, %v531
  %v587 = vpack.c.bf16 %v534, %v533
  %v588 = vpack.c.bf16 %v536, %v535
  %v589 = vpack.c.bf16 %v538, %v537
  %v590 = vpack.c.bf16 %v540, %v539
  %v591 = vpack.c.bf16 %v542, %v541
  %v592 = vpack.c.bf16 %v544, %v543
  %v593 = vpack.c.bf16 %v546, %v545
  %v594 = vpack.c.bf16 %v548, %v547
  %v595 = vpack.c.bf16 %v550, %v549
  %v596 = vpack.c.bf16 %v552, %v551
  %v597 = vpack.c.bf16 %v554, %v553
  %v598 = vpack.c.bf16 %v556, %v555
  %v599 = vpack.c.bf16 %v558, %v557
  %v600 = vpack.c.bf16 %v560, %v559
  %v601 = vpack.c.bf16 %v562, %v561
  %v602 = vpack.c.bf16 %v564, %v563
  %v603 = vpack.c.bf16 %v566, %v565
  %v604 = vpack.c.bf16 %v568, %v567
  %v605 = vpack.c.bf16 %v570, %v569
  %v606 = vpack.c.bf16 %v572, %v571
  %v607 = vpack.c.bf16 %v574, %v573
  %v608 = vpack.c.bf16 %v576, %v575
  %v609 = vld [vmem:[%s3] sm:$0xf]
  %v610 = vld [vmem:[%s3 + $0x4] sm:$0xf]
  %v611 = vld [vmem:[%s3 + $0x8] sm:$0xf]
  %v612 = vld [vmem:[%s3 + $0xc] sm:$0xf]
  %v613 = vld [vmem:[%s3 + $0x10] sm:$0xf]
  %v614 = vld [vmem:[%s3 + $0x14] sm:$0xf]
  %v615 = vld [vmem:[%s3 + $0x18] sm:$0xf]
  %v616 = vld [vmem:[%s3 + $0x1c] sm:$0xf]
  %v617 = vld [vmem:[%s3 + $0x20] sm:$0xf]
  %v618 = vld [vmem:[%s3 + $0x24] sm:$0xf]
  %v619 = vld [vmem:[%s3 + $0x28] sm:$0xf]
  %v620 = vld [vmem:[%s3 + $0x2c] sm:$0xf]
  %v621 = vld [vmem:[%s3 + $0x30] sm:$0xf]
  %v622 = vld [vmem:[%s3 + $0x34] sm:$0xf]
  %v623 = vld [vmem:[%s3 + $0x38] sm:$0xf]
  %v624 = vld [vmem:[%s3 + $0x3c] sm:$0xf]
  %v641 = vunpack.c.l.b16 %v609
  %v642 = vunpack.c.l.b16 %v610
  %v643 = vunpack.c.l.b16 %v611
  %v644 = vunpack.c.l.b16 %v612
  %v645 = vunpack.c.l.b16 %v613
  %v646 = vunpack.c.l.b16 %v614
  %v647 = vunpack.c.l.b16 %v615
  %v648 = vunpack.c.l.b16 %v616
  %v649 = vunpack.c.l.b16 %v617
  %v650 = vunpack.c.l.b16 %v618
  %v651 = vunpack.c.l.b16 %v619
  %v652 = vunpack.c.l.b16 %v620
  %v653 = vunpack.c.l.b16 %v621
  %v654 = vunpack.c.l.b16 %v622
  %v655 = vunpack.c.l.b16 %v623
  %v656 = vunpack.c.l.b16 %v624
  %v657 = vpack.c.b16 %v642, %v641
  %v658 = vpack.c.b16 %v644, %v643
  %v659 = vpack.c.b16 %v646, %v645
  %v660 = vpack.c.b16 %v648, %v647
  %v661 = vpack.c.b16 %v650, %v649
  %v662 = vpack.c.b16 %v652, %v651
  %v663 = vpack.c.b16 %v654, %v653
  %v664 = vpack.c.b16 %v656, %v655
  %673 = vmatpush.bf16.msra.mxu0 %v664
  %674 = vmatpush.bf16.msra.mxu0 %v663
  %675 = vmatpush.bf16.msra.mxu0 %v662
  %676 = vmatpush.bf16.msra.mxu0 %v661
  %677 = vmatpush.bf16.msra.mxu0 %v660
  %678 = vmatpush.bf16.msra.mxu0 %v659
  %679 = vmatpush.bf16.msra.mxu0 %v658
  %680 = vmatpush.bf16.msra.mxu0 %v657
  %681 = vmatmul.bf16.gmra.mxu0 %v577
  %v682 = vpop.f32.mrf.mxu0
  %v683 = vadd.f32 0.0, %v682
  %v684 = vpop.f32.mrf.mxu0
  %v685 = vadd.f32 0.0, %v684
  %686 = vmatmul.bf16.gmra.mxu0 %v578
  %v687 = vpop.f32.mrf.mxu0
  %v688 = vadd.f32 0.0, %v687
  %v689 = vpop.f32.mrf.mxu0
  %v690 = vadd.f32 0.0, %v689
  %691 = vmatmul.bf16.gmra.mxu0 %v579
  %v692 = vpop.f32.mrf.mxu0
  %v693 = vadd.f32 0.0, %v692
  %v694 = vpop.f32.mrf.mxu0
  %v695 = vadd.f32 0.0, %v694
  %696 = vmatmul.bf16.gmra.mxu0 %v580
  %v697 = vpop.f32.mrf.mxu0
  %v698 = vadd.f32 0.0, %v697
  %v699 = vpop.f32.mrf.mxu0
  %v700 = vadd.f32 0.0, %v699
  %701 = vmatmul.bf16.gmra.mxu0 %v581
  %v702 = vpop.f32.mrf.mxu0
  %v703 = vadd.f32 0.0, %v702
  %v704 = vpop.f32.mrf.mxu0
  %v705 = vadd.f32 0.0, %v704
  %706 = vmatmul.bf16.gmra.mxu0 %v582
  %v707 = vpop.f32.mrf.mxu0
  %v708 = vadd.f32 0.0, %v707
  %v709 = vpop.f32.mrf.mxu0
  %v710 = vadd.f32 0.0, %v709
  %711 = vmatmul.bf16.gmra.mxu0 %v583
  %v712 = vpop.f32.mrf.mxu0
  %v713 = vadd.f32 0.0, %v712
  %v714 = vpop.f32.mrf.mxu0
  %v715 = vadd.f32 0.0, %v714
  %716 = vmatmul.bf16.gmra.mxu0 %v584
  %v717 = vpop.f32.mrf.mxu0
  %v718 = vadd.f32 0.0, %v717
  %v719 = vpop.f32.mrf.mxu0
  %v720 = vadd.f32 0.0, %v719
  %721 = vmatmul.bf16.gmra.mxu0 %v585
  %v722 = vpop.f32.mrf.mxu0
  %v723 = vadd.f32 0.0, %v722
  %v724 = vpop.f32.mrf.mxu0
  %v725 = vadd.f32 0.0, %v724
  %726 = vmatmul.bf16.gmra.mxu0 %v586
  %v727 = vpop.f32.mrf.mxu0
  %v728 = vadd.f32 0.0, %v727
  %v729 = vpop.f32.mrf.mxu0
  %v730 = vadd.f32 0.0, %v729
  %731 = vmatmul.bf16.gmra.mxu0 %v587
  %v732 = vpop.f32.mrf.mxu0
  %v733 = vadd.f32 0.0, %v732
  %v734 = vpop.f32.mrf.mxu0
  %v735 = vadd.f32 0.0, %v734
  %736 = vmatmul.bf16.gmra.mxu0 %v588
  %v737 = vpop.f32.mrf.mxu0
  %v738 = vadd.f32 0.0, %v737
  %v739 = vpop.f32.mrf.mxu0
  %v740 = vadd.f32 0.0, %v739
  %741 = vmatmul.bf16.gmra.mxu0 %v589
  %v742 = vpop.f32.mrf.mxu0
  %v743 = vadd.f32 0.0, %v742
  %v744 = vpop.f32.mrf.mxu0
  %v745 = vadd.f32 0.0, %v744
  %746 = vmatmul.bf16.gmra.mxu0 %v590
  %v747 = vpop.f32.mrf.mxu0
  %v748 = vadd.f32 0.0, %v747
  %v749 = vpop.f32.mrf.mxu0
  %v750 = vadd.f32 0.0, %v749
  %751 = vmatmul.bf16.gmra.mxu0 %v591
  %v752 = vpop.f32.mrf.mxu0
  %v753 = vadd.f32 0.0, %v752
  %v754 = vpop.f32.mrf.mxu0
  %v755 = vadd.f32 0.0, %v754
  %756 = vmatmul.bf16.gmra.mxu0 %v592
  %v757 = vpop.f32.mrf.mxu0
  %v758 = vadd.f32 0.0, %v757
  %v759 = vpop.f32.mrf.mxu0
  %v760 = vadd.f32 0.0, %v759
  %761 = vmatmul.bf16.gmra.mxu0 %v593
  %v762 = vpop.f32.mrf.mxu0
  %v763 = vadd.f32 0.0, %v762
  %v764 = vpop.f32.mrf.mxu0
  %v765 = vadd.f32 0.0, %v764
  %766 = vmatmul.bf16.gmra.mxu0 %v594
  %v767 = vpop.f32.mrf.mxu0
  %v768 = vadd.f32 0.0, %v767
  %v769 = vpop.f32.mrf.mxu0
  %v770 = vadd.f32 0.0, %v769
  %771 = vmatmul.bf16.gmra.mxu0 %v595
  %v772 = vpop.f32.mrf.mxu0
  %v773 = vadd.f32 0.0, %v772
  %v774 = vpop.f32.mrf.mxu0
  %v775 = vadd.f32 0.0, %v774
  %776 = vmatmul.bf16.gmra.mxu0 %v596
  %v777 = vpop.f32.mrf.mxu0
  %v778 = vadd.f32 0.0, %v777
  %v779 = vpop.f32.mrf.mxu0
  %v780 = vadd.f32 0.0, %v779
  %781 = vmatmul.bf16.gmra.mxu0 %v597
  %v782 = vpop.f32.mrf.mxu0
  %v783 = vadd.f32 0.0, %v782
  %v784 = vpop.f32.mrf.mxu0
  %v785 = vadd.f32 0.0, %v784
  %786 = vmatmul.bf16.gmra.mxu0 %v598
  %v787 = vpop.f32.mrf.mxu0
  %v788 = vadd.f32 0.0, %v787
  %v789 = vpop.f32.mrf.mxu0
  %v790 = vadd.f32 0.0, %v789
  %791 = vmatmul.bf16.gmra.mxu0 %v599
  %v792 = vpop.f32.mrf.mxu0
  %v793 = vadd.f32 0.0, %v792
  %v794 = vpop.f32.mrf.mxu0
  %v795 = vadd.f32 0.0, %v794
  %796 = vmatmul.bf16.gmra.mxu0 %v600
  %v797 = vpop.f32.mrf.mxu0
  %v798 = vadd.f32 0.0, %v797
  %v799 = vpop.f32.mrf.mxu0
  %v800 = vadd.f32 0.0, %v799
  %801 = vmatmul.bf16.gmra.mxu0 %v601
  %v802 = vpop.f32.mrf.mxu0
  %v803 = vadd.f32 0.0, %v802
  %v804 = vpop.f32.mrf.mxu0
  %v805 = vadd.f32 0.0, %v804
  %806 = vmatmul.bf16.gmra.mxu0 %v602
  %v807 = vpop.f32.mrf.mxu0
  %v808 = vadd.f32 0.0, %v807
  %v809 = vpop.f32.mrf.mxu0
  %v810 = vadd.f32 0.0, %v809
  %811 = vmatmul.bf16.gmra.mxu0 %v603
  %v812 = vpop.f32.mrf.mxu0
  %v813 = vadd.f32 0.0, %v812
  %v814 = vpop.f32.mrf.mxu0
  %v815 = vadd.f32 0.0, %v814
  %816 = vmatmul.bf16.gmra.mxu0 %v604
  %v817 = vpop.f32.mrf.mxu0
  %v818 = vadd.f32 0.0, %v817
  %v819 = vpop.f32.mrf.mxu0
  %v820 = vadd.f32 0.0, %v819
  %821 = vmatmul.bf16.gmra.mxu0 %v605
  %v822 = vpop.f32.mrf.mxu0
  %v823 = vadd.f32 0.0, %v822
  %v824 = vpop.f32.mrf.mxu0
  %v825 = vadd.f32 0.0, %v824
  %826 = vmatmul.bf16.gmra.mxu0 %v606
  %v827 = vpop.f32.mrf.mxu0
  %v828 = vadd.f32 0.0, %v827
  %v829 = vpop.f32.mrf.mxu0
  %v830 = vadd.f32 0.0, %v829
  %831 = vmatmul.bf16.gmra.mxu0 %v607
  %v832 = vpop.f32.mrf.mxu0
  %v833 = vadd.f32 0.0, %v832
  %v834 = vpop.f32.mrf.mxu0
  %v835 = vadd.f32 0.0, %v834
  %836 = vmatmul.bf16.gmra.mxu0 %v608
  %v837 = vpop.f32.mrf.mxu0
  %v838 = vadd.f32 0.0, %v837
  %v839 = vpop.f32.mrf.mxu0
  %v840 = vadd.f32 0.0, %v839
  %841 = vdwg.mxu0
  %v842 = vmax.f32 %v683, 0.0
  %v843 = vmax.f32 %v685, 0.0
  %v844 = vmax.f32 %v688, 0.0
  %v845 = vmax.f32 %v690, 0.0
  %v846 = vmax.f32 %v693, 0.0
  %v847 = vmax.f32 %v695, 0.0
  %v848 = vmax.f32 %v698, 0.0
  %v849 = vmax.f32 %v700, 0.0
  %v850 = vmax.f32 %v703, 0.0
  %v851 = vmax.f32 %v705, 0.0
  %v852 = vmax.f32 %v708, 0.0
  %v853 = vmax.f32 %v710, 0.0
  %v854 = vmax.f32 %v713, 0.0
  %v855 = vmax.f32 %v715, 0.0
  %v856 = vmax.f32 %v718, 0.0
  %v857 = vmax.f32 %v720, 0.0
  %v858 = vmax.f32 %v723, 0.0
  %v859 = vmax.f32 %v725, 0.0
  %v860 = vmax.f32 %v728, 0.0
  %v861 = vmax.f32 %v730, 0.0
  %v862 = vmax.f32 %v733, 0.0
  %v863 = vmax.f32 %v735, 0.0
  %v864 = vmax.f32 %v738, 0.0
  %v865 = vmax.f32 %v740, 0.0
  %v866 = vmax.f32 %v743, 0.0
  %v867 = vmax.f32 %v745, 0.0
  %v868 = vmax.f32 %v748, 0.0
  %v869 = vmax.f32 %v750, 0.0
  %v870 = vmax.f32 %v753, 0.0
  %v871 = vmax.f32 %v755, 0.0
  %v872 = vmax.f32 %v758, 0.0
  %v873 = vmax.f32 %v760, 0.0
  %v874 = vmax.f32 %v763, 0.0
  %v875 = vmax.f32 %v765, 0.0
  %v876 = vmax.f32 %v768, 0.0
  %v877 = vmax.f32 %v770, 0.0
  %v878 = vmax.f32 %v773, 0.0
  %v879 = vmax.f32 %v775, 0.0
  %v880 = vmax.f32 %v778, 0.0
  %v881 = vmax.f32 %v780, 0.0
  %v882 = vmax.f32 %v783, 0.0
  %v883 = vmax.f32 %v785, 0.0
  %v884 = vmax.f32 %v788, 0.0
  %v885 = vmax.f32 %v790, 0.0
  %v886 = vmax.f32 %v793, 0.0
  %v887 = vmax.f32 %v795, 0.0
  %v888 = vmax.f32 %v798, 0.0
  %v889 = vmax.f32 %v800, 0.0
  %v890 = vmax.f32 %v803, 0.0
  %v891 = vmax.f32 %v805, 0.0
  %v892 = vmax.f32 %v808, 0.0
  %v893 = vmax.f32 %v810, 0.0
  %v894 = vmax.f32 %v813, 0.0
  %v895 = vmax.f32 %v815, 0.0
  %v896 = vmax.f32 %v818, 0.0
  %v897 = vmax.f32 %v820, 0.0
  %v898 = vmax.f32 %v823, 0.0
  %v899 = vmax.f32 %v825, 0.0
  %v900 = vmax.f32 %v828, 0.0
  %v901 = vmax.f32 %v830, 0.0
  %v902 = vmax.f32 %v833, 0.0
  %v903 = vmax.f32 %v835, 0.0
  %v904 = vmax.f32 %v838, 0.0
  %v905 = vmax.f32 %v840, 0.0
  %v906 = vpack.c.bf16 %v843, %v842
  %v907 = vpack.c.bf16 %v845, %v844
  %v908 = vpack.c.bf16 %v847, %v846
  %v909 = vpack.c.bf16 %v849, %v848
  %v910 = vpack.c.bf16 %v851, %v850
  %v911 = vpack.c.bf16 %v853, %v852
  %v912 = vpack.c.bf16 %v855, %v854
  %v913 = vpack.c.bf16 %v857, %v856
  %v914 = vpack.c.bf16 %v859, %v858
  %v915 = vpack.c.bf16 %v861, %v860
  %v916 = vpack.c.bf16 %v863, %v862
  %v917 = vpack.c.bf16 %v865, %v864
  %v918 = vpack.c.bf16 %v867, %v866
  %v919 = vpack.c.bf16 %v869, %v868
  %v920 = vpack.c.bf16 %v871, %v870
  %v921 = vpack.c.bf16 %v873, %v872
  %v922 = vpack.c.bf16 %v875, %v874
  %v923 = vpack.c.bf16 %v877, %v876
  %v924 = vpack.c.bf16 %v879, %v878
  %v925 = vpack.c.bf16 %v881, %v880
  %v926 = vpack.c.bf16 %v883, %v882
  %v927 = vpack.c.bf16 %v885, %v884
  %v928 = vpack.c.bf16 %v887, %v886
  %v929 = vpack.c.bf16 %v889, %v888
  %v930 = vpack.c.bf16 %v891, %v890
  %v931 = vpack.c.bf16 %v893, %v892
  %v932 = vpack.c.bf16 %v895, %v894
  %v933 = vpack.c.bf16 %v897, %v896
  %v934 = vpack.c.bf16 %v899, %v898
  %v935 = vpack.c.bf16 %v901, %v900
  %v936 = vpack.c.bf16 %v903, %v902
  %v937 = vpack.c.bf16 %v905, %v904
  %v938 = vld [vmem:[%s4] sm:$0xf]
  %v939 = vld [vmem:[%s4 + $0x4] sm:$0xf]
  %v940 = vld [vmem:[%s4 + $0x8] sm:$0xf]
  %v941 = vld [vmem:[%s4 + $0xc] sm:$0xf]
  %v942 = vld [vmem:[%s4 + $0x10] sm:$0xf]
  %v943 = vld [vmem:[%s4 + $0x14] sm:$0xf]
  %v944 = vld [vmem:[%s4 + $0x18] sm:$0xf]
  %v945 = vld [vmem:[%s4 + $0x1c] sm:$0xf]
  %v946 = vld [vmem:[%s4 + $0x20] sm:$0xf]
  %v947 = vld [vmem:[%s4 + $0x24] sm:$0xf]
  %v948 = vld [vmem:[%s4 + $0x28] sm:$0xf]
  %v949 = vld [vmem:[%s4 + $0x2c] sm:$0xf]
  %v950 = vld [vmem:[%s4 + $0x30] sm:$0xf]
  %v951 = vld [vmem:[%s4 + $0x34] sm:$0xf]
  %v952 = vld [vmem:[%s4 + $0x38] sm:$0xf]
  %v953 = vld [vmem:[%s4 + $0x3c] sm:$0xf]
  %v970 = vunpack.c.l.b16 %v938
  %v971 = vunpack.c.l.b16 %v939
  %v972 = vunpack.c.l.b16 %v940
  %v973 = vunpack.c.l.b16 %v941
  %v974 = vunpack.c.l.b16 %v942
  %v975 = vunpack.c.l.b16 %v943
  %v976 = vunpack.c.l.b16 %v944
  %v977 = vunpack.c.l.b16 %v945
  %v978 = vunpack.c.l.b16 %v946
  %v979 = vunpack.c.l.b16 %v947
  %v980 = vunpack.c.l.b16 %v948
  %v981 = vunpack.c.l.b16 %v949
  %v982 = vunpack.c.l.b16 %v950
  %v983 = vunpack.c.l.b16 %v951
  %v984 = vunpack.c.l.b16 %v952
  %v985 = vunpack.c.l.b16 %v953
  %v986 = vpack.c.b16 %v971, %v970
  %v987 = vpack.c.b16 %v973, %v972
  %v988 = vpack.c.b16 %v975, %v974
  %v989 = vpack.c.b16 %v977, %v976
  %v990 = vpack.c.b16 %v979, %v978
  %v991 = vpack.c.b16 %v981, %v980
  %v992 = vpack.c.b16 %v983, %v982
  %v993 = vpack.c.b16 %v985, %v984
  %1002 = vmatpush.bf16.msra.mxu0 %v993
  %1003 = vmatpush.bf16.msra.mxu0 %v992
  %1004 = vmatpush.bf16.msra.mxu0 %v991
  %1005 = vmatpush.bf16.msra.mxu0 %v990
  %1006 = vmatpush.bf16.msra.mxu0 %v989
  %1007 = vmatpush.bf16.msra.mxu0 %v988
  %1008 = vmatpush.bf16.msra.mxu0 %v987
  %1009 = vmatpush.bf16.msra.mxu0 %v986
  %1010 = vmatmul.bf16.gmra.mxu0 %v906
  %v1011 = vpop.f32.mrf.mxu0
  %v1012 = vadd.f32 0.0, %v1011
  %v1013 = vpop.f32.mrf.mxu0
  %v1014 = vadd.f32 0.0, %v1013
  %1015 = vmatmul.bf16.gmra.mxu0 %v907
  %v1016 = vpop.f32.mrf.mxu0
  %v1017 = vadd.f32 0.0, %v1016
  %v1018 = vpop.f32.mrf.mxu0
  %v1019 = vadd.f32 0.0, %v1018
  %1020 = vmatmul.bf16.gmra.mxu0 %v908
  %v1021 = vpop.f32.mrf.mxu0
  %v1022 = vadd.f32 0.0, %v1021
  %v1023 = vpop.f32.mrf.mxu0
  %v1024 = vadd.f32 0.0, %v1023
  %1025 = vmatmul.bf16.gmra.mxu0 %v909
  %v1026 = vpop.f32.mrf.mxu0
  %v1027 = vadd.f32 0.0, %v1026
  %v1028 = vpop.f32.mrf.mxu0
  %v1029 = vadd.f32 0.0, %v1028
  %1030 = vmatmul.bf16.gmra.mxu0 %v910
  %v1031 = vpop.f32.mrf.mxu0
  %v1032 = vadd.f32 0.0, %v1031
  %v1033 = vpop.f32.mrf.mxu0
  %v1034 = vadd.f32 0.0, %v1033
  %1035 = vmatmul.bf16.gmra.mxu0 %v911
  %v1036 = vpop.f32.mrf.mxu0
  %v1037 = vadd.f32 0.0, %v1036
  %v1038 = vpop.f32.mrf.mxu0
  %v1039 = vadd.f32 0.0, %v1038
  %1040 = vmatmul.bf16.gmra.mxu0 %v912
  %v1041 = vpop.f32.mrf.mxu0
  %v1042 = vadd.f32 0.0, %v1041
  %v1043 = vpop.f32.mrf.mxu0
  %v1044 = vadd.f32 0.0, %v1043
  %1045 = vmatmul.bf16.gmra.mxu0 %v913
  %v1046 = vpop.f32.mrf.mxu0
  %v1047 = vadd.f32 0.0, %v1046
  %v1048 = vpop.f32.mrf.mxu0
  %v1049 = vadd.f32 0.0, %v1048
  %1050 = vmatmul.bf16.gmra.mxu0 %v914
  %v1051 = vpop.f32.mrf.mxu0
  %v1052 = vadd.f32 0.0, %v1051
  %v1053 = vpop.f32.mrf.mxu0
  %v1054 = vadd.f32 0.0, %v1053
  %1055 = vmatmul.bf16.gmra.mxu0 %v915
  %v1056 = vpop.f32.mrf.mxu0
  %v1057 = vadd.f32 0.0, %v1056
  %v1058 = vpop.f32.mrf.mxu0
  %v1059 = vadd.f32 0.0, %v1058
  %1060 = vmatmul.bf16.gmra.mxu0 %v916
  %v1061 = vpop.f32.mrf.mxu0
  %v1062 = vadd.f32 0.0, %v1061
  %v1063 = vpop.f32.mrf.mxu0
  %v1064 = vadd.f32 0.0, %v1063
  %1065 = vmatmul.bf16.gmra.mxu0 %v917
  %v1066 = vpop.f32.mrf.mxu0
  %v1067 = vadd.f32 0.0, %v1066
  %v1068 = vpop.f32.mrf.mxu0
  %v1069 = vadd.f32 0.0, %v1068
  %1070 = vmatmul.bf16.gmra.mxu0 %v918
  %v1071 = vpop.f32.mrf.mxu0
  %v1072 = vadd.f32 0.0, %v1071
  %v1073 = vpop.f32.mrf.mxu0
  %v1074 = vadd.f32 0.0, %v1073
  %1075 = vmatmul.bf16.gmra.mxu0 %v919
  %v1076 = vpop.f32.mrf.mxu0
  %v1077 = vadd.f32 0.0, %v1076
  %v1078 = vpop.f32.mrf.mxu0
  %v1079 = vadd.f32 0.0, %v1078
  %1080 = vmatmul.bf16.gmra.mxu0 %v920
  %v1081 = vpop.f32.mrf.mxu0
  %v1082 = vadd.f32 0.0, %v1081
  %v1083 = vpop.f32.mrf.mxu0
  %v1084 = vadd.f32 0.0, %v1083
  %1085 = vmatmul.bf16.gmra.mxu0 %v921
  %v1086 = vpop.f32.mrf.mxu0
  %v1087 = vadd.f32 0.0, %v1086
  %v1088 = vpop.f32.mrf.mxu0
  %v1089 = vadd.f32 0.0, %v1088
  %1090 = vmatmul.bf16.gmra.mxu0 %v922
  %v1091 = vpop.f32.mrf.mxu0
  %v1092 = vadd.f32 0.0, %v1091
  %v1093 = vpop.f32.mrf.mxu0
  %v1094 = vadd.f32 0.0, %v1093
  %1095 = vmatmul.bf16.gmra.mxu0 %v923
  %v1096 = vpop.f32.mrf.mxu0
  %v1097 = vadd.f32 0.0, %v1096
  %v1098 = vpop.f32.mrf.mxu0
  %v1099 = vadd.f32 0.0, %v1098
  %1100 = vmatmul.bf16.gmra.mxu0 %v924
  %v1101 = vpop.f32.mrf.mxu0
  %v1102 = vadd.f32 0.0, %v1101
  %v1103 = vpop.f32.mrf.mxu0
  %v1104 = vadd.f32 0.0, %v1103
  %1105 = vmatmul.bf16.gmra.mxu0 %v925
  %v1106 = vpop.f32.mrf.mxu0
  %v1107 = vadd.f32 0.0, %v1106
  %v1108 = vpop.f32.mrf.mxu0
  %v1109 = vadd.f32 0.0, %v1108
  %1110 = vmatmul.bf16.gmra.mxu0 %v926
  %v1111 = vpop.f32.mrf.mxu0
  %v1112 = vadd.f32 0.0, %v1111
  %v1113 = vpop.f32.mrf.mxu0
  %v1114 = vadd.f32 0.0, %v1113
  %1115 = vmatmul.bf16.gmra.mxu0 %v927
  %v1116 = vpop.f32.mrf.mxu0
  %v1117 = vadd.f32 0.0, %v1116
  %v1118 = vpop.f32.mrf.mxu0
  %v1119 = vadd.f32 0.0, %v1118
  %1120 = vmatmul.bf16.gmra.mxu0 %v928
  %v1121 = vpop.f32.mrf.mxu0
  %v1122 = vadd.f32 0.0, %v1121
  %v1123 = vpop.f32.mrf.mxu0
  %v1124 = vadd.f32 0.0, %v1123
  %1125 = vmatmul.bf16.gmra.mxu0 %v929
  %v1126 = vpop.f32.mrf.mxu0
  %v1127 = vadd.f32 0.0, %v1126
  %v1128 = vpop.f32.mrf.mxu0
  %v1129 = vadd.f32 0.0, %v1128
  %1130 = vmatmul.bf16.gmra.mxu0 %v930
  %v1131 = vpop.f32.mrf.mxu0
  %v1132 = vadd.f32 0.0, %v1131
  %v1133 = vpop.f32.mrf.mxu0
  %v1134 = vadd.f32 0.0, %v1133
  %1135 = vmatmul.bf16.gmra.mxu0 %v931
  %v1136 = vpop.f32.mrf.mxu0
  %v1137 = vadd.f32 0.0, %v1136
  %v1138 = vpop.f32.mrf.mxu0
  %v1139 = vadd.f32 0.0, %v1138
  %1140 = vmatmul.bf16.gmra.mxu0 %v932
  %v1141 = vpop.f32.mrf.mxu0
  %v1142 = vadd.f32 0.0, %v1141
  %v1143 = vpop.f32.mrf.mxu0
  %v1144 = vadd.f32 0.0, %v1143
  %1145 = vmatmul.bf16.gmra.mxu0 %v933
  %v1146 = vpop.f32.mrf.mxu0
  %v1147 = vadd.f32 0.0, %v1146
  %v1148 = vpop.f32.mrf.mxu0
  %v1149 = vadd.f32 0.0, %v1148
  %1150 = vmatmul.bf16.gmra.mxu0 %v934
  %v1151 = vpop.f32.mrf.mxu0
  %v1152 = vadd.f32 0.0, %v1151
  %v1153 = vpop.f32.mrf.mxu0
  %v1154 = vadd.f32 0.0, %v1153
  %1155 = vmatmul.bf16.gmra.mxu0 %v935
  %v1156 = vpop.f32.mrf.mxu0
  %v1157 = vadd.f32 0.0, %v1156
  %v1158 = vpop.f32.mrf.mxu0
  %v1159 = vadd.f32 0.0, %v1158
  %1160 = vmatmul.bf16.gmra.mxu0 %v936
  %v1161 = vpop.f32.mrf.mxu0
  %v1162 = vadd.f32 0.0, %v1161
  %v1163 = vpop.f32.mrf.mxu0
  %v1164 = vadd.f32 0.0, %v1163
  %1165 = vmatmul.bf16.gmra.mxu0 %v937
  %v1166 = vpop.f32.mrf.mxu0
  %v1167 = vadd.f32 0.0, %v1166
  %v1168 = vpop.f32.mrf.mxu0
  %v1169 = vadd.f32 0.0, %v1168
  %1170 = vdwg.mxu0
  %1171 = vst [vmem:[%s5] sm:$0xff] %v1012
  %1172 = vst [vmem:[%s5 + $0x8] sm:$0xff] %v1014
  %1173 = vst [vmem:[%s5 + $0x10] sm:$0xff] %v1017
  %1174 = vst [vmem:[%s5 + $0x18] sm:$0xff] %v1019
  %1175 = vst [vmem:[%s5 + $0x20] sm:$0xff] %v1022
  %1176 = vst [vmem:[%s5 + $0x28] sm:$0xff] %v1024
  %1177 = vst [vmem:[%s5 + $0x30] sm:$0xff] %v1027
  %1178 = vst [vmem:[%s5 + $0x38] sm:$0xff] %v1029
  %1179 = vst [vmem:[%s5 + $0x40] sm:$0xff] %v1032
  %1180 = vst [vmem:[%s5 + $0x48] sm:$0xff] %v1034
  %1181 = vst [vmem:[%s5 + $0x50] sm:$0xff] %v1037
  %1182 = vst [vmem:[%s5 + $0x58] sm:$0xff] %v1039
  %1183 = vst [vmem:[%s5 + $0x60] sm:$0xff] %v1042
  %1184 = vst [vmem:[%s5 + $0x68] sm:$0xff] %v1044
  %1185 = vst [vmem:[%s5 + $0x70] sm:$0xff] %v1047
  %1186 = vst [vmem:[%s5 + $0x78] sm:$0xff] %v1049
  %1187 = vst [vmem:[%s5 + $0x80] sm:$0xff] %v1052
  %1188 = vst [vmem:[%s5 + $0x88] sm:$0xff] %v1054
  %1189 = vst [vmem:[%s5 + $0x90] sm:$0xff] %v1057
  %1190 = vst [vmem:[%s5 + $0x98] sm:$0xff] %v1059
  %1191 = vst [vmem:[%s5 + $0xa0] sm:$0xff] %v1062
  %1192 = vst [vmem:[%s5 + $0xa8] sm:$0xff] %v1064
  %1193 = vst [vmem:[%s5 + $0xb0] sm:$0xff] %v1067
  %1194 = vst [vmem:[%s5 + $0xb8] sm:$0xff] %v1069
  %1195 = vst [vmem:[%s5 + $0xc0] sm:$0xff] %v1072
  %1196 = vst [vmem:[%s5 + $0xc8] sm:$0xff] %v1074
  %1197 = vst [vmem:[%s5 + $0xd0] sm:$0xff] %v1077
  %1198 = vst [vmem:[%s5 + $0xd8] sm:$0xff] %v1079
  %1199 = vst [vmem:[%s5 + $0xe0] sm:$0xff] %v1082
  %1200 = vst [vmem:[%s5 + $0xe8] sm:$0xff] %v1084
  %1201 = vst [vmem:[%s5 + $0xf0] sm:$0xff] %v1087
  %1202 = vst [vmem:[%s5 + $0xf8] sm:$0xff] %v1089
  %1203 = vst [vmem:[%s5 + $0x100] sm:$0xff] %v1092
  %1204 = vst [vmem:[%s5 + $0x108] sm:$0xff] %v1094
  %1205 = vst [vmem:[%s5 + $0x110] sm:$0xff] %v1097
  %1206 = vst [vmem:[%s5 + $0x118] sm:$0xff] %v1099
  %1207 = vst [vmem:[%s5 + $0x120] sm:$0xff] %v1102
  %1208 = vst [vmem:[%s5 + $0x128] sm:$0xff] %v1104
  %1209 = vst [vmem:[%s5 + $0x130] sm:$0xff] %v1107
  %1210 = vst [vmem:[%s5 + $0x138] sm:$0xff] %v1109
  %1211 = vst [vmem:[%s5 + $0x140] sm:$0xff] %v1112
  %1212 = vst [vmem:[%s5 + $0x148] sm:$0xff] %v1114
  %1213 = vst [vmem:[%s5 + $0x150] sm:$0xff] %v1117
  %1214 = vst [vmem:[%s5 + $0x158] sm:$0xff] %v1119
  %1215 = vst [vmem:[%s5 + $0x160] sm:$0xff] %v1122
  %1216 = vst [vmem:[%s5 + $0x168] sm:$0xff] %v1124
  %1217 = vst [vmem:[%s5 + $0x170] sm:$0xff] %v1127
  %1218 = vst [vmem:[%s5 + $0x178] sm:$0xff] %v1129
  %1219 = vst [vmem:[%s5 + $0x180] sm:$0xff] %v1132
  %1220 = vst [vmem:[%s5 + $0x188] sm:$0xff] %v1134
  %1221 = vst [vmem:[%s5 + $0x190] sm:$0xff] %v1137
  %1222 = vst [vmem:[%s5 + $0x198] sm:$0xff] %v1139
  %1223 = vst [vmem:[%s5 + $0x1a0] sm:$0xff] %v1142
  %1224 = vst [vmem:[%s5 + $0x1a8] sm:$0xff] %v1144
  %1225 = vst [vmem:[%s5 + $0x1b0] sm:$0xff] %v1147
  %1226 = vst [vmem:[%s5 + $0x1b8] sm:$0xff] %v1149
  %1227 = vst [vmem:[%s5 + $0x1c0] sm:$0xff] %v1152
  %1228 = vst [vmem:[%s5 + $0x1c8] sm:$0xff] %v1154
  %1229 = vst [vmem:[%s5 + $0x1d0] sm:$0xff] %v1157
  %1230 = vst [vmem:[%s5 + $0x1d8] sm:$0xff] %v1159
  %1231 = vst [vmem:[%s5 + $0x1e0] sm:$0xff] %v1162
  %1232 = vst [vmem:[%s5 + $0x1e8] sm:$0xff] %v1164
  %1233 = vst [vmem:[%s5 + $0x1f0] sm:$0xff] %v1167
  %1234 = vst [vmem:[%s5 + $0x1f8] sm:$0xff] %v1169
  // Predicated region
  $region22: #{homo_mlp_forward.1} parent=0 // pred_check
    _
  $region23: #{homo_mlp_forward.1} parent=0 // pred_check_branch
    %1236 = sbr.rel (0) target = $region25
  $region24: #{homo_mlp_forward.1} parent=0 // pred_region
    _
  $region25: #{homo_mlp_forward.1} parent=0 // pred_fallthru
    _
  // Predicated region
  $region26: #{homo_mlp_forward.1} parent=0 // pred_check
    _
  $region27: #{homo_mlp_forward.1} parent=0 // pred_check_branch
    %1238 = sbr.rel (0) target = $region29
  $region28: #{homo_mlp_forward.1} parent=0 // pred_region
    _
  $region29: #{homo_mlp_forward.1} parent=0 // pred_fallthru
    _

</llo_original>
